<compile_context>
chip_gen: v7x
topology: tpu7x:2x2x1
jax: 0.10.0
libtpu: 0.0.40
codegen_flags: <defaults>
</compile_context>

<pallas_src>
import jax
import jax.numpy as jnp
from jax import lax
from jax.experimental import pallas as pl
from jax.experimental.pallas import tpu as pltpu


def _round_up(x: int, m: int) -> int:
    return (x + m - 1) // m * m


def _pad_axis_to(x, axis: int, target: int):
    pad = target - x.shape[axis]
    if pad <= 0:
        return x
    widths = [(0, 0)] * x.ndim
    widths[axis] = (0, pad)
    return jnp.pad(x, widths)


def _make_max_sim_kernel(*, tile_m, nd_pad, batches_per_group, groups_per_chunk, out_w):
    """One grid step = one (tile_m, D_pad) query tile x one doc chunk.

    q_ref   : (tile_m, D_pad)            bf16 flattened query token rows
    d_ref   : (db*nd_pad, D_pad)         bf16 flattened doc token rows of this chunk
    out_ref : (tile_m, out_w) f32        column j = max_s <q_row, doc (chunk, j) token s>
    """
    rows_per_group = batches_per_group * nd_pad
    align = rows_per_group & (-rows_per_group)   # largest power-of-two divisor

    def kernel(q_ref, d_ref, out_ref):
        # Hoisted constant (JAX does not CSE broadcast_in_dim inside loops).
        lane = lax.broadcasted_iota(jnp.int32, (tile_m, out_w), 1)

        def group_body(g, acc):
            q = q_ref[...]
            row0 = pl.multiple_of(g * rows_per_group, align)
            d_g = d_ref[pl.ds(row0, rows_per_group), :]          # (G*nd_pad, D_pad)
            # bf16 MXU matmul, f32 accumulation; contraction on the feature axis of
            # both operands (standard flash-style NT contraction).
            sim = lax.dot_general(
                q, d_g,
                dimension_numbers=(((1,), (1,)), ((), ())),
                preferred_element_type=jnp.float32,
            )                                                     # (tile_m, G*nd_pad)
            # Per-doc-batch max over its tokens.  No padding mask needed: padded doc
            # tokens are host-side copies of a real token.  Slices are 128-lane
            # aligned whenever batches_per_group > 1 (guaranteed by construction).
            for k in range(batches_per_group):
                col = jnp.max(sim[:, k * nd_pad:(k + 1) * nd_pad], axis=1,
                              keepdims=True)                      # (tile_m, 1)
                acc = jnp.where(lane == g * batches_per_group + k, col, acc)
            return acc

        out_ref[...] = lax.fori_loop(
            0, groups_per_chunk, group_body,
            jnp.zeros((tile_m, out_w), jnp.float32),
            unroll=bool(groups_per_chunk <= 8))

    return kernel


def colbert_pairwise_ce_loss(query_embeddings, doc_embeddings, *,
                             compute_dtype=jnp.bfloat16, max_query_tile=512):
    """query_embeddings: (B, Nq, D); doc_embeddings: (B, Nd, D) -> scalar loss."""
    B, Nq, D = query_embeddings.shape
    Bd, Nd, Dd = doc_embeddings.shape
    assert B == Bd and D == Dd, "batch / dim mismatch"

    itemsize = jnp.dtype(compute_dtype).itemsize
    sub = 32 // itemsize                      # sublane pack: 16 for bf16, 8 for f32
    nq_pad = _round_up(Nq, sub)
    nd_pad = _round_up(Nd, sub)
    d_dim = _round_up(D, 128)                 # feed the MXU K dim with full lanes

    # ---- host-side layout prep (all padding is max/dot-neutral) ----------------
    q = _pad_axis_to(query_embeddings.astype(compute_dtype), 1, nq_pad)   # zero rows
    q = _pad_axis_to(q, 2, d_dim)                                         # zero K cols
    d = doc_embeddings.astype(compute_dtype)
    if nd_pad != Nd:
        # Duplicate a real token: max over the batch's tokens is unchanged, so no
        # in-kernel -1e30 mask is needed on the sim tile.
        d = jnp.pad(d, ((0, 0), (0, nd_pad - Nd), (0, 0)), mode="edge")
    d = _pad_axis_to(d, 2, d_dim)

    # ---- query-row tiling: >= 2 tiles when possible (v7x megacore work) --------
    total_q_rows = B * nq_pad
    tile_m = min(max_query_tile, max(sub, (total_q_rows // 2) // sub * sub))
    num_q_tiles = pl.cdiv(total_q_rows, tile_m)
    rows_pad = num_q_tiles * tile_m

    # ---- generation-aware VMEM budget (~0.75 x physical VMEM) ------------------
    try:
        vmem_cap = int(pltpu.get_tpu_info().vmem_capacity_bytes)
    except Exception:
        vmem_cap = 64 * 1024 * 1024           # safe floor (v7x per-core VMEM)
    vmem_budget = vmem_cap * 3 // 4

    # ---- doc chunking -----------------------------------------------------------
    # Group G doc batches per MXU matmul so the N dim is >= 512, but only when the
    # per-batch slices of the sim tile stay 128-lane aligned (no relayout risk).
    if nd_pad % 128 == 0 and nd_pad < 512:
        G = max(1, 512 // nd_pad)
    else:
        G = 1
    grp_rows = G * nd_pad
    grp_bytes = grp_rows * d_dim * itemsize

    def _fits(n_groups):
        db_ = n_groups * G
        out_w_ = _round_up(db_, 128)
        used = (2 * tile_m * d_dim * itemsize       # q block (double buffered)
                + 2 * n_groups * grp_bytes          # doc chunk (double buffered)
                + 2 * tile_m * out_w_ * 4           # out block (double buffered)
                + tile_m * grp_rows * 4             # f32 sim temporary
                + 2 * tile_m * out_w_ * 4)          # accumulator + slack
        return used + used // 4 <= vmem_budget      # 25% headroom

    n_groups = 1
    n_groups_all = pl.cdiv(B, G)
    while n_groups < n_groups_all and _fits(n_groups + 1):
        n_groups += 1
    num_chunks = pl.cdiv(B, n_groups * G)           # == 1 whenever the docs fit (typical)
    db = pl.cdiv(pl.cdiv(B, num_chunks), G) * G     # doc batches per chunk (balanced)
    n_groups = db // G
    out_w = _round_up(db, 128)
    b_total = num_chunks * db
    # TODO(synk): for doc sets far beyond VMEM, a manual double-buffered HBM stream
    # (pl.ANY + make_async_copy) would avoid re-streaming chunks per query tile.

    if b_total != B:                                # zero doc batches: dropped later
        d = jnp.pad(d, ((0, b_total - B), (0, 0), (0, 0)))

    q_flat = _pad_axis_to(q.reshape(B * nq_pad, d_dim), 0, rows_pad)
    d_flat = d.reshape(b_total * nd_pad, d_dim)

    kernel = _make_max_sim_kernel(tile_m=tile_m, nd_pad=nd_pad, batches_per_group=G,
                                  groups_per_chunk=n_groups, out_w=out_w)

    max_sim = pl.pallas_call(
        kernel,
        out_shape=jax.ShapeDtypeStruct((rows_pad, num_chunks * out_w), jnp.float32),
        grid=(num_q_tiles, num_chunks),
        in_specs=[
            # Query tile: block index constant across the doc-chunk axis -> fetched
            # once per query tile.
            pl.BlockSpec((tile_m, d_dim), lambda i, c: (i, 0)),
            # Doc chunk: constant index when num_chunks == 1 -> resident in VMEM,
            # streamed from HBM exactly once for the whole kernel.
            pl.BlockSpec((db * nd_pad, d_dim), lambda i, c: (c, 0)),
        ],
        # Each grid step owns a distinct lane-dense output block: one unmasked
        # full-block store per step, no init phase, no cross-step accumulation.
        out_specs=pl.BlockSpec((tile_m, out_w), lambda i, c: (i, c)),
        compiler_params=pltpu.CompilerParams(
            dimension_semantics=("parallel", "arbitrary"),
            vmem_limit_bytes=int(vmem_budget),
        ),
    )(q_flat, d_flat)

    # ---- tiny O(B^2) epilogue in plain JAX --------------------------------------
    ms = max_sim[:B * nq_pad]                                        # real query rows
    ms = ms.reshape(B * nq_pad, num_chunks, out_w)[:, :, :db]        # real cols/chunk
    ms = ms.reshape(B * nq_pad, num_chunks * db)[:, :B]              # real doc batches
    ms = ms.reshape(B, nq_pad, B)[:, :Nq, :]                         # real query tokens
    scores = jnp.sum(ms, axis=1)                                     # (B, B)
    pos = jnp.diagonal(scores)
    # NOTE: the -1e6 diagonal mask (inherited from the PyTorch module) assumes
    # |scores| << 1e6; kept as-is for parity with the reference semantics.
    neg = jnp.max(scores - jnp.eye(B, dtype=scores.dtype) * 1e6, axis=1)
    return jnp.mean(jax.nn.softplus(neg - pos))


def _reference_loss(q, d):
    """Pure-JAX reference matching the PyTorch module semantics (f32 math)."""
    scores = jnp.einsum(
        "bnd,csd->bcns", q, d, precision=lax.Precision.HIGHEST
    ).max(axis=3).sum(axis=2)
    pos = jnp.diagonal(scores)
    neg = jnp.max(scores - jnp.eye(scores.shape[0], dtype=scores.dtype) * 1e6, axis=1)
    return jnp.mean(jax.nn.softplus(neg - pos))


if __name__ == "__main__":
    key = jax.random.PRNGKey(0)
    kq, kd = jax.random.split(key)

    B, Nq, Nd, D = 2, 8, 16, 32
    query_embeddings = jax.random.normal(kq, (B, Nq, D), dtype=jnp.float32)
    doc_embeddings = jax.random.normal(kd, (B, Nd, D), dtype=jnp.float32)

    loss = jax.block_until_ready(
        colbert_pairwise_ce_loss(query_embeddings, doc_embeddings))

    # Apples-to-apples reference: identical bf16 rounding of the matmul inputs,
    # f32 math everywhere else (the kernel is bf16-MXU / f32-accumulate by design).
    q_r = query_embeddings.astype(jnp.bfloat16).astype(jnp.float32)
    d_r = doc_embeddings.astype(jnp.bfloat16).astype(jnp.float32)
    ref = jax.block_until_ready(_reference_loss(q_r, d_r))
    assert jnp.allclose(loss, ref, atol=5e-3, rtol=5e-3), (loss, ref)

    print("KERNEL_OK")
</pallas_src>

<mosaic_0001>
module attributes {stable_mosaic.version = 11 : i64} {
  func.func @kernel(%arg0: i32, %arg1: i32, %arg2: memref<16x128xbf16, #tpu.memory_space<vmem>>, %arg3: memref<32x128xbf16, #tpu.memory_space<vmem>>, %arg4: memref<16x128xf32, #tpu.memory_space<vmem>>) attributes {dimension_semantics = [#tpu.dimension_semantics<parallel>, #tpu.dimension_semantics<arbitrary>], iteration_bounds = array<i64: 2, 1>, scalar_prefetch = 0 : i64, scratch_operands = 0 : i64, tpu.core_type = #tpu.core_type<tc>, window_params = [{transform_indices = @transform_0, window_bounds = array<i64: 16, 128>}, {transform_indices = @transform_1, window_bounds = array<i64: 32, 128>}, {transform_indices = @transform_2, window_bounds = array<i64: 16, 128>}]} {
    %0 = tpu.iota {dimensions = array<i32: 1>} : vector<16x128xi32>
    %cst = arith.constant 0.000000e+00 : f32
    %1 = vector.broadcast %cst : f32 to vector<16x128xf32>
    %c0_i32 = arith.constant 0 : i32
    %c0 = arith.constant 0 : index
    %c0_0 = arith.constant 0 : index
    %2 = vector.load %arg2[%c0, %c0_0] : memref<16x128xbf16, #tpu.memory_space<vmem>>, vector<16x128xbf16>
    %c16_i32 = arith.constant 16 : i32
    %3 = arith.muli %c0_i32, %c16_i32 : i32
    %4 = tpu.assume_multiple %3, 16 : i32
    %5 = arith.index_cast %4 : i32 to index
    %c0_1 = arith.constant 0 : index
    %6 = vector.load %arg3[%5, %c0_1] : memref<32x128xbf16, #tpu.memory_space<vmem>>, vector<16x128xbf16>
    %cst_2 = arith.constant dense<0.000000e+00> : vector<16x16xf32>
    %7 = tpu.matmul %2, %6, %cst_2 {dimension_numbers = #tpu.dot_dimension_numbers<[1], [1], [0], [0], [0, 0, 1, 0], [], []>} : vector<16x128xbf16>, vector<16x128xbf16>, vector<16x16xf32> -> vector<16x16xf32>
    %cst_3 = arith.constant dense<0xFF800000> : vector<16xf32>
    %8 = vector.multi_reduction <maximumf>, %7, %cst_3 [1] : vector<16x16xf32> to vector<16xf32>
    %9 = vector.shape_cast %8 : vector<16xf32> to vector<16x1xf32>
    %c1_i32 = arith.constant 1 : i32
    %10 = arith.muli %c0_i32, %c1_i32 : i32
    %c0_i32_4 = arith.constant 0 : i32
    %11 = arith.addi %10, %c0_i32_4 : i32
    %12 = vector.broadcast %11 : i32 to vector<16x128xi32>
    %13 = arith.cmpi eq, %0, %12 : vector<16x128xi32>
    %14 = vector.shape_cast %9 : vector<16x1xf32> to vector<16x1xf32>
    %15 = vector.broadcast %14 : vector<16x1xf32> to vector<16x128xf32>
    %16 = arith.select %13, %15, %1 : vector<16x128xi1>, vector<16x128xf32>
    %c1_i32_5 = arith.constant 1 : i32
    %c0_6 = arith.constant 0 : index
    %c0_7 = arith.constant 0 : index
    %17 = vector.load %arg2[%c0_6, %c0_7] : memref<16x128xbf16, #tpu.memory_space<vmem>>, vector<16x128xbf16>
    %c16_i32_8 = arith.constant 16 : i32
    %18 = arith.muli %c1_i32_5, %c16_i32_8 : i32
    %19 = tpu.assume_multiple %18, 16 : i32
    %20 = arith.index_cast %19 : i32 to index
    %c0_9 = arith.constant 0 : index
    %21 = vector.load %arg3[%20, %c0_9] : memref<32x128xbf16, #tpu.memory_space<vmem>>, vector<16x128xbf16>
    %cst_10 = arith.constant dense<0.000000e+00> : vector<16x16xf32>
    %22 = tpu.matmul %17, %21, %cst_10 {dimension_numbers = #tpu.dot_dimension_numbers<[1], [1], [0], [0], [0, 0, 1, 0], [], []>} : vector<16x128xbf16>, vector<16x128xbf16>, vector<16x16xf32> -> vector<16x16xf32>
    %cst_11 = arith.constant dense<0xFF800000> : vector<16xf32>
    %23 = vector.multi_reduction <maximumf>, %22, %cst_11 [1] : vector<16x16xf32> to vector<16xf32>
    %24 = vector.shape_cast %23 : vector<16xf32> to vector<16x1xf32>
    %c1_i32_12 = arith.constant 1 : i32
    %25 = arith.muli %c1_i32_5, %c1_i32_12 : i32
    %c0_i32_13 = arith.constant 0 : i32
    %26 = arith.addi %25, %c0_i32_13 : i32
    %27 = vector.broadcast %26 : i32 to vector<16x128xi32>
    %28 = arith.cmpi eq, %0, %27 : vector<16x128xi32>
    %29 = vector.shape_cast %24 : vector<16x1xf32> to vector<16x1xf32>
    %30 = vector.broadcast %29 : vector<16x1xf32> to vector<16x128xf32>
    %31 = arith.select %28, %30, %16 : vector<16x128xi1>, vector<16x128xf32>
    %c2_i32 = arith.constant 2 : i32
    %c0_14 = arith.constant 0 : index
    %c0_15 = arith.constant 0 : index
    %32 = vector.load %arg4[%c0_14, %c0_15] : memref<16x128xf32, #tpu.memory_space<vmem>>, vector<16x128xf32>
    tpu.vector_store %arg4[%c0_14, %c0_15], %31 {strides = array<i32>} : memref<16x128xf32, #tpu.memory_space<vmem>>, vector<16x128xf32>,
    return
  }
  func.func @transform_0(%arg0: i32, %arg1: i32) -> (i32, i32) {
    %c0_i32 = arith.constant 0 : i32
    %c0_i32_0 = arith.constant 0 : i32
    return %arg0, %c0_i32 : i32, i32
  }
  func.func @transform_1(%arg0: i32, %arg1: i32) -> (i32, i32) {
    %c0_i32 = arith.constant 0 : i32
    %c0_i32_0 = arith.constant 0 : i32
    return %arg1, %c0_i32 : i32, i32
  }
  func.func @transform_2(%arg0: i32, %arg1: i32) -> (i32, i32) {
    %c0_i32 = arith.constant 0 : i32
    return %arg0, %arg1 : i32, i32
  }
}

</mosaic_0001>

<llo_original>
// kernel: tpu_custom_call.1
$region0: #{tpu_custom_call.1}
  #allocation0 [shape = 'u32[]', space=smem, size = 0x4, offset = 0x4, fixed_abs, tag = 'smem constant byte address 0x4 - core index']
  #allocation1 [shape = 'u32[144,128]{1,0:T(1,128)}', space=vmem, size = 0x12000, scoped, tag = 'internal scratch']
  %s0 = inlined_call_operand.hbm [shape: bf16[32,128], index: 0, kind: input, shape index: {}]
  %s1 = inlined_call_operand.hbm [shape: bf16[32,128], index: 1, kind: input, shape index: {}]
  %s2 = inlined_call_operand.hbm [shape: f32[32,128], index: 2, kind: output, shape index: {}]
  %s3 = sld [smem:[#allocation0]]
  $region49: #{tpu_custom_call.1} parent=0
    _
  %s5 = ssub.s32 1, %s3
  %s6 = scalar_select 0, %s5, %s3
  $region1: #{tpu_custom_call.1} parent=0
    #allocation2 [shape = 'u8[8192]{0}', space=vmem, size = 0x2000, scoped, tag = 'input window, operand 0']
    #allocation3 [shape = 's32[2]{0}', space=sflag, size = 0x8, scoped, tag = 'scoped memory for tpu_custom_call.1']
    #allocation4 [shape = 's32[2]{0}', space=sflag, size = 0x8, scoped, tag = 'scoped memory for tpu_custom_call.1']
    #allocation5 [shape = 'u8[8192]{0}', space=vmem, size = 0x2000, scoped, tag = 'input window, operand 1, single buffered']
    #allocation6 [shape = 's32[1]{0}', space=sflag, size = 0x4, scoped, tag = 'scoped memory for tpu_custom_call.1']
    #allocation7 [shape = 'u8[16384]{0}', space=vmem, size = 0x4000, scoped, tag = 'output window, operand 0']
    %7 = vsyncpa [#allocation3], 0
    %s8 = scalar_lea.sflag [#allocation3], 1
    %9 = vsyncpa %s8, 0
    %10 = vsyncpa [#allocation6], 0
    %11 = vsyncpa [#allocation4], 0
    %s12 = scalar_lea.sflag [#allocation4], 1
    %13 = vsyncpa %s12, 0
    loop: start=0, step=1, limit=4
    $region2: #{tpu_custom_call.1} parent=1 // loop_pre_header
      _
    $region3: #{tpu_custom_call.1} parent=1 // loop_header
      %s15 = sphi 0, %s19
      %p16 = scmp.ge.s32.totalorder %s15, 4
      %s22 = sphi 0, %s34
      %s23 = sphi 0, %s30
      %s24 = sphi 0, %s22
      %s25 = sphi 0, %s23
      %s26 = sphi 0, %s24
      %s27 = sphi 0, %s25
      %s37 = sphi 0, %s39
      %s40 = sphi 0, %s37
      %s41 = sphi 0, %s40
      %s57 = sphi 0, %s41
      %s63 = sphi 0, %s65
      %s66 = sphi 0, %s63
      %s67 = sphi 0, %s66
      %s83 = sphi 0, %s67
      %s91 = sphi 0, %s93
      %s94 = sphi 0, %s91
      %s95 = sphi 0, %s94
      %s111 = sphi 0, %s95
    $region4: #{tpu_custom_call.1} parent=1 // loop_header_branch
      %18 = sbr.rel (%p16) target = $region8
    $region5: #{tpu_custom_call.1} parent=1 // loop_body
      %s20 = ssub.s32 %s15, 1
      %s21 = ssub.s32 %s15, 2
      %s28 = sadd.s32 1, %s23
      %p29 = scmp.ge.s32.totalorder %s28, 1
      %s30 = scalar_select %p29, 0, %s28
      %s31 = sadd.s32 1, %s22
      %s32 = scalar_select %p29, %s31, %s22
      %p33 = scmp.ge.s32.totalorder %s32, 2
      %s34 = scalar_select %p33, 0, %s32
      %s35 = ssub.s32 %s22, %s34
      %p36 = scmp.eq.s32.totalorder %s35, 0
      %s38 = sadd.s32 %s37, 1
      %s39 = scalar_select %p36, %s37, %s38
      %p42 = pneg %p36
      %p43 = scmp.eq.s32.totalorder %s15, 1
      %p44 = por %p42, %p43
      %p45 = scmp.ne.s32.totalorder %s37, %s40
      %p46 = scmp.eq.s32.totalorder %s15, 0
      %p47 = por %p45, %p46
      %p48 = scmp.ne.s32.totalorder %s37, %s40
      %p49 = scmp.eq.s32.totalorder %s20, 1
      %p50 = por %p48, %p49
      %p51 = scmp.ne.s32.totalorder %s40, %s41
      %p52 = scmp.eq.s32.totalorder %s20, 0
      %p53 = por %p51, %p52
      %p54 = scmp.ne.s32.totalorder %s40, %s41
      %p55 = scmp.eq.s32.totalorder %s21, 1
      %p56 = por %p54, %p55
      %p58 = scmp.ne.s32.totalorder %s41, %s57
      %p59 = scmp.eq.s32.totalorder %s21, 0
      %p60 = por %p58, %p59
      %s61 = ssub.s32 %s23, %s30
      %p62 = scmp.eq.s32.totalorder %s61, 0
      %s64 = sadd.s32 %s63, 1
      %s65 = scalar_select %p62, %s63, %s64
      %p68 = pneg %p62
      %p69 = scmp.eq.s32.totalorder %s15, 1
      %p70 = por %p68, %p69
      %p71 = scmp.ne.s32.totalorder %s63, %s66
      %p72 = scmp.eq.s32.totalorder %s15, 0
      %p73 = por %p71, %p72
      %p74 = scmp.ne.s32.totalorder %s63, %s66
      %p75 = scmp.eq.s32.totalorder %s20, 1
      %p76 = por %p74, %p75
      %p77 = scmp.ne.s32.totalorder %s66, %s67
      %p78 = scmp.eq.s32.totalorder %s20, 0
      %p79 = por %p77, %p78
      %p80 = scmp.ne.s32.totalorder %s66, %s67
      %p81 = scmp.eq.s32.totalorder %s21, 1
      %p82 = por %p80, %p81
      %p84 = scmp.ne.s32.totalorder %s67, %s83
      %p85 = scmp.eq.s32.totalorder %s21, 0
      %p86 = por %p84, %p85
      %s87 = ssub.s32 %s22, %s34
      %s88 = ssub.s32 %s23, %s30
      %s89 = sor.u32 %s87, %s88
      %p90 = scmp.eq.s32.totalorder %s89, 0
      %s92 = sadd.s32 %s91, 1
      %s93 = scalar_select %p90, %s91, %s92
      %p96 = pneg %p90
      %p97 = scmp.eq.s32.totalorder %s15, 1
      %p98 = por %p96, %p97
      %p99 = scmp.ne.s32.totalorder %s91, %s94
      %p100 = scmp.eq.s32.totalorder %s15, 0
      %p101 = por %p99, %p100
      %p102 = scmp.ne.s32.totalorder %s91, %s94
      %p103 = scmp.eq.s32.totalorder %s20, 1
      %p104 = por %p102, %p103
      %p105 = scmp.ne.s32.totalorder %s94, %s95
      %p106 = scmp.eq.s32.totalorder %s20, 0
      %p107 = por %p105, %p106
      %p108 = scmp.ne.s32.totalorder %s94, %s95
      %p109 = scmp.eq.s32.totalorder %s21, 1
      %p110 = por %p108, %p109
      %p112 = scmp.ne.s32.totalorder %s95, %s111
      %p113 = scmp.eq.s32.totalorder %s21, 0
      %p114 = por %p112, %p113
      %p115 = scmp.le.s32.totalorder 1, %s15
      %p116 = scmp.lt.s32.totalorder %s15, 3
      %p117 = pnand %p115, %p116
      %p118 = pneg %p117
      // Predicated region
      $region9: #{tpu_custom_call.1} parent=5 // pred_check
        _
      $region10: #{tpu_custom_call.1} parent=5 // pred_check_branch
        %120 = sbr.rel (%p117) target = $region12
      $region11: #{tpu_custom_call.1} parent=5 // pred_region
        %s121 = ssub.s32 %s15, 1
        // Predicated region
        $region13: #{tpu_custom_call.1} parent=11 // pred_check
          %p122 = pneg %p79
        $region14: #{tpu_custom_call.1} parent=11 // pred_check_branch
          %124 = sbr.rel (%p122) target = $region16
        $region15: #{tpu_custom_call.1} parent=11 // pred_region
          %s125 = smul.u32 4, %s25
          %s127 = ssub.s32 256, 256
          %128 = vsyncadd [#allocation6], %s127
          %s129 = smul.addr %s125, 64
          %s130 = scalar_lea.hbm %s1, %s129
          %s131 = sshll.u32 [#allocation5], 4
          %s132 = int_to_ptr.vmem [resolvable:$true] %s131
          %137 = dma.hbm_to_vmem [thread:$0]  %s130, 256, %s132, [#allocation6], 64, 64, 4
        $region16: #{tpu_custom_call.1} parent=11 // pred_fallthru
          _
      $region12: #{tpu_custom_call.1} parent=5 // pred_fallthru
        _
      %p138 = scmp.lt.s32.totalorder %s15, 2
      // Predicated region
      $region17: #{tpu_custom_call.1} parent=5 // pred_check
        %p139 = pneg %p138
      $region18: #{tpu_custom_call.1} parent=5 // pred_check_branch
        %141 = sbr.rel (%p139) target = $region20
      $region19: #{tpu_custom_call.1} parent=5 // pred_region
        // Predicated region
        $region21: #{tpu_custom_call.1} parent=19 // pred_check
          %p142 = pneg %p47
        $region22: #{tpu_custom_call.1} parent=19 // pred_check_branch
          %144 = sbr.rel (%p142) target = $region24
        $region23: #{tpu_custom_call.1} parent=19 // pred_region
          %s145 = sand.u32 %s37, 1
          %s146 = scalar_lea.sflag [#allocation3], %s145
          %s147 = sand.u32 %s37, 1
          %s148 = smul.addr %s147, 8
          %s149 = scalar_lea.vmem [#allocation2], %s148
          %s150 = smul.u32 2, %s22
          %s152 = ssub.s32 128, 128
          %153 = vsyncadd %s146, %s152
          %s154 = smul.addr %s150, 64
          %s155 = scalar_lea.hbm %s0, %s154
          %s156 = sshll.u32 %s149, 4
          %s157 = int_to_ptr.vmem [resolvable:$true] %s156
          %162 = dma.hbm_to_vmem [thread:$0]  %s155, 128, %s157, %s146, 64, 64, 4
        $region24: #{tpu_custom_call.1} parent=19 // pred_fallthru
          _
      $region20: #{tpu_custom_call.1} parent=5 // pred_fallthru
        _
      %p163 = scmp.le.s32.totalorder 1, %s15
      %p164 = scmp.lt.s32.totalorder %s15, 3
      %p165 = pnand %p163, %p164
      %p166 = pneg %p165
      // Predicated region
      $region25: #{tpu_custom_call.1} parent=5 // pred_check
        _
      $region26: #{tpu_custom_call.1} parent=5 // pred_check_branch
        %168 = sbr.rel (%p165) target = $region28
      $region27: #{tpu_custom_call.1} parent=5 // pred_region
        %s169 = ssub.s32 %s15, 1
        %s170 = sand.u32 %s40, 1
        %s171 = scalar_lea.sflag [#allocation3], %s170
        %s172 = sand.u32 %s40, 1
        %s173 = smul.addr %s172, 8
        %s174 = scalar_lea.vmem [#allocation2], %s173
        // Predicated region
        $region29: #{tpu_custom_call.1} parent=27 // pred_check
          %p175 = pneg %p53
        $region30: #{tpu_custom_call.1} parent=27 // pred_check_branch
          %177 = sbr.rel (%p175) target = $region32
        $region31: #{tpu_custom_call.1} parent=27 // pred_region
          %178 = dma.done %s171, 128
        $region32: #{tpu_custom_call.1} parent=27 // pred_fallthru
          _
        // Predicated region
        $region33: #{tpu_custom_call.1} parent=27 // pred_check
          %p179 = pneg %p79
        $region34: #{tpu_custom_call.1} parent=27 // pred_check_branch
          %181 = sbr.rel (%p179) target = $region36
        $region35: #{tpu_custom_call.1} parent=27 // pred_region
          %182 = dma.done [#allocation6], 256
        $region36: #{tpu_custom_call.1} parent=27 // pred_fallthru
          _
        %s183 = sand.u32 %s40, 1
        %s184 = scalar_lea.sflag [#allocation3], %s183
        %s185 = sand.u32 %s40, 1
        %s186 = smul.addr %s185, 8
        %s187 = scalar_lea.vmem [#allocation2], %s186
        %p188 = pneg %p53
        %p189 = pneg %p50
        %p190 = pneg %p79
        %p191 = pneg %p76
        %p192 = pneg %p107
        %p193 = pneg %p104
        %s194 = sand.u32 %s94, 1
        %s195 = scalar_lea.sflag [#allocation4], %s194
        %s196 = sand.u32 %s94, 1
        %s197 = smul.addr %s196, 16
        %s198 = scalar_lea.vmem [#allocation7], %s197
        %s199 = smul.u32 2, %s24
        %s200 = smul.u32 4, %s25
        %s201 = smul.u32 2, %s24
        %v203 = vlaneseq
        %v204 = vand.u32 %v203, 127
        %v205 = vld [vmem:[%s174] sm:$0xf]
        %v206 = vld [vmem:[%s174 + $0x4] sm:$0xf]
        %v207 = vld [vmem:[#allocation5] sm:$0xf]
        %v208 = vld [vmem:[#allocation5 + $0x4] sm:$0xf]
        %v211 = vunpack.c.l.b16 %v205
        %v212 = vunpack.c.l.b16 %v206
        %v213 = vpack.c.b16 %v212, %v211
        %v217 = vunpack.c.l.b16 %v207
        %v218 = vunpack.c.l.b16 %v208
        %v219 = vpack.c.b16 %v218, %v217
        %221 = vmatprep.subr.bf16.mxu0 0
        %222 = vmatpush1.bf16.xpose.msra.mxu0 %v219
        %223 = vmatprep.subr.bf16.mxu0 0
        %224 = vmatpush1.bf16.xpose.msra.mxu0 0
        %225 = vmatprep.subr.bf16.mxu0 0
        %226 = vmatpush1.bf16.xpose.msra.mxu0 0
        %227 = vmatprep.subr.bf16.mxu0 0
        %228 = vmatpush1.bf16.xpose.msra.mxu0 0
        %229 = vmatprep.subr.bf16.mxu0 0
        %230 = vmatpush1.bf16.xpose.msra.mxu0 0
        %231 = vmatprep.subr.bf16.mxu0 0
        %232 = vmatpush1.bf16.xpose.msra.mxu0 0
        %233 = vmatprep.subr.bf16.mxu0 0
        %234 = vmatpush1.bf16.xpose.msra.mxu0 0
        %235 = vmatprep.subr.bf16.mxu0 0
        %236 = vmatpush1.bf16.xpose.msra.mxu0 0
        %237 = vmatprep.subr.bf16.mxu0 0
        %238 = vmatpush1.bf16.xpose.msra.mxu0 0
        %239 = vmatprep.subr.bf16.mxu0 0
        %240 = vmatpush1.bf16.xpose.msra.mxu0 0
        %241 = vmatprep.subr.bf16.mxu0 0
        %242 = vmatpush1.bf16.xpose.msra.mxu0 0
        %243 = vmatprep.subr.bf16.mxu0 0
        %244 = vmatpush1.bf16.xpose.msra.mxu0 0
        %245 = vmatprep.subr.bf16.mxu0 0
        %246 = vmatpush1.bf16.xpose.msra.mxu0 0
        %247 = vmatprep.subr.bf16.mxu0 0
        %248 = vmatpush1.bf16.xpose.msra.mxu0 0
        %249 = vmatprep.subr.bf16.mxu0 0
        %250 = vmatpush1.bf16.xpose.msra.mxu0 0
        %251 = vmatprep.subr.bf16.mxu0 0
        %252 = vmatpush1.bf16.xpose.msra.mxu0 0
        %253 = vmatprep.mubr.bf16.mxu0 0
        %254 = vmatmul.mubr.bf16.gmra.mrb[0].mxu0 %v213
        %v255 = vpop.f32.mrb[0].mxu0
        %v256 = vadd.f32 0.0, %v255
        %v257 = vpop.f32.mrb[0].mxu0
        %v258 = vpop.f32.mrb[0].mxu0
        %v259 = vadd.f32 0.0, %v258
        %v260 = vpop.f32.mrb[0].mxu0
        %261 = vdwg.mxu0
        %vm262 = vcmask 130048
        %v263 = vsel %vm262, %v256, -inf
        %264 = vmax.xlane.f32.xlu0 %v263
        %v265 = vpop.xlane.xlu0 %264
        %v266 = vsel %vm262, %v259, -inf
        %267 = vmax.xlane.f32.xlu0 %v266
        %v268 = vpop.xlane.xlu0 %267
        %vm269 = vcmp.eq.s32.totalorder %v204, 0
        %v270 = vsel %vm269, %v265, 0.0
        %v271 = vsel %vm269, %v268, 0.0
        %s272 = scalar_lea.vmem [#allocation5], 8
        %v273 = vld [vmem:[%s272] sm:$0xf]
        %v274 = vld [vmem:[%s272 + $0x4] sm:$0xf]
        %v277 = vunpack.c.l.b16 %v273
        %v278 = vunpack.c.l.b16 %v274
        %v279 = vpack.c.b16 %v278, %v277
        %281 = vmatprep.subr.bf16.mxu0 0
        %282 = vmatpush1.bf16.xpose.msra.mxu0 %v279
        %283 = vmatprep.subr.bf16.mxu0 0
        %284 = vmatpush1.bf16.xpose.msra.mxu0 0
        %285 = vmatprep.subr.bf16.mxu0 0
        %286 = vmatpush1.bf16.xpose.msra.mxu0 0
        %287 = vmatprep.subr.bf16.mxu0 0
        %288 = vmatpush1.bf16.xpose.msra.mxu0 0
        %289 = vmatprep.subr.bf16.mxu0 0
        %290 = vmatpush1.bf16.xpose.msra.mxu0 0
        %291 = vmatprep.subr.bf16.mxu0 0
        %292 = vmatpush1.bf16.xpose.msra.mxu0 0
        %293 = vmatprep.subr.bf16.mxu0 0
        %294 = vmatpush1.bf16.xpose.msra.mxu0 0
        %295 = vmatprep.subr.bf16.mxu0 0
        %296 = vmatpush1.bf16.xpose.msra.mxu0 0
        %297 = vmatprep.subr.bf16.mxu0 0
        %298 = vmatpush1.bf16.xpose.msra.mxu0 0
        %299 = vmatprep.subr.bf16.mxu0 0
        %300 = vmatpush1.bf16.xpose.msra.mxu0 0
        %301 = vmatprep.subr.bf16.mxu0 0
        %302 = vmatpush1.bf16.xpose.msra.mxu0 0
        %303 = vmatprep.subr.bf16.mxu0 0
        %304 = vmatpush1.bf16.xpose.msra.mxu0 0
        %305 = vmatprep.subr.bf16.mxu0 0
        %306 = vmatpush1.bf16.xpose.msra.mxu0 0
        %307 = vmatprep.subr.bf16.mxu0 0
        %308 = vmatpush1.bf16.xpose.msra.mxu0 0
        %309 = vmatprep.subr.bf16.mxu0 0
        %310 = vmatpush1.bf16.xpose.msra.mxu0 0
        %311 = vmatprep.subr.bf16.mxu0 0
        %312 = vmatpush1.bf16.xpose.msra.mxu0 0
        %313 = vmatprep.mubr.bf16.mxu0 0
        %314 = vmatmul.mubr.bf16.gmra.mrb[0].mxu0 %v213
        %v315 = vpop.f32.mrb[0].mxu0
        %v316 = vadd.f32 0.0, %v315
        %v317 = vpop.f32.mrb[0].mxu0
        %v318 = vpop.f32.mrb[0].mxu0
        %v319 = vadd.f32 0.0, %v318
        %v320 = vpop.f32.mrb[0].mxu0
        %321 = vdwg.mxu0
        %v322 = vsel %vm262, %v316, -inf
        %323 = vmax.xlane.f32.xlu0 %v322
        %v324 = vpop.xlane.xlu0 %323
        %v325 = vsel %vm262, %v319, -inf
        %326 = vmax.xlane.f32.xlu0 %v325
        %v327 = vpop.xlane.xlu0 %326
        %vm328 = vcmp.eq.s32.totalorder %v204, 1
        %v329 = vsel %vm328, %v324, %v270
        %v330 = vsel %vm328, %v327, %v271
        %331 = vst [vmem:[%s198] sm:$0xff] %v329
        %332 = vst [vmem:[%s198 + $0x8] sm:$0xff] %v330
        %s333 = sand.u32 %s94, 1
        %s334 = scalar_lea.sflag [#allocation4], %s333
        %s335 = sand.u32 %s94, 1
        %s336 = smul.addr %s335, 16
        %s337 = scalar_lea.vmem [#allocation7], %s336
        // Predicated region
        $region37: #{tpu_custom_call.1} parent=27 // pred_check
          %p338 = pneg %p104
        $region38: #{tpu_custom_call.1} parent=27 // pred_check_branch
          %340 = sbr.rel (%p338) target = $region40
        $region39: #{tpu_custom_call.1} parent=27 // pred_region
          %s341 = smul.u32 2, %s24
          %s343 = ssub.s32 256, 256
          %344 = vsyncadd %s334, %s343
          %s345 = sadd.s32 %s25, %s341
          %s346 = smul.addr %s345, 128
          %s347 = scalar_lea.hbm %s2, %s346
          %s348 = sshll.u32 %s337, 4
          %s349 = int_to_ptr.vmem [resolvable:$true] %s348
          %354 = dma.vmem_to_hbm [thread:$0]  %s349, 256, %s347, %s334, 128, 128, 8
        $region40: #{tpu_custom_call.1} parent=27 // pred_fallthru
          _
      $region28: #{tpu_custom_call.1} parent=5 // pred_fallthru
        _
      %p355 = scmp.le.s32.totalorder 2, %s15
      // Predicated region
      $region41: #{tpu_custom_call.1} parent=5 // pred_check
        %p356 = pneg %p355
      $region42: #{tpu_custom_call.1} parent=5 // pred_check_branch
        %358 = sbr.rel (%p356) target = $region44
      $region43: #{tpu_custom_call.1} parent=5 // pred_region
        %s359 = ssub.s32 %s15, 2
        // Predicated region
        $region45: #{tpu_custom_call.1} parent=43 // pred_check
          %p360 = pneg %p110
        $region46: #{tpu_custom_call.1} parent=43 // pred_check_branch
          %362 = sbr.rel (%p360) target = $region48
        $region47: #{tpu_custom_call.1} parent=43 // pred_region
          %s363 = sand.u32 %s95, 1
          %s364 = scalar_lea.sflag [#allocation4], %s363
          %s365 = sand.u32 %s95, 1
          %s366 = smul.addr %s365, 16
          %s367 = scalar_lea.vmem [#allocation7], %s366
          %368 = dma.done %s364, 256
        $region48: #{tpu_custom_call.1} parent=43 // pred_fallthru
          _
      $region44: #{tpu_custom_call.1} parent=5 // pred_fallthru
        _
    $region6: #{tpu_custom_call.1} parent=1 // loop_footer
      %s19 = sadd.s32 1, %s15
    $region7: #{tpu_custom_call.1} parent=1 // loop_footer_branch
      %14 = sbr.rel target = $region3
    $region8: #{tpu_custom_call.1} parent=1 // loop_exit
      _
    %369 = vsyncpa [#allocation3], 1
    %s370 = scalar_lea.sflag [#allocation3], 1
    %371 = vsyncpa %s370, 1
    %372 = vsyncpa [#allocation6], 1
    %373 = vsyncpa [#allocation4], 1
    %s374 = scalar_lea.sflag [#allocation4], 1
    %375 = vsyncpa %s374, 1

</llo_original>
